<compile_context>
chip_gen: v7x
topology: tpu7x:2x2x1
jax: 0.10.0
libtpu: 0.0.40
codegen_flags: <defaults>
</compile_context>

<pallas_src>
import math
import functools

import jax
import jax.numpy as jnp
from jax.experimental import pallas as pl
from jax.experimental.pallas import tpu as pltpu


def _round_up(x, m):
    return (x + m - 1) // m * m


def _best_tile(n, candidates):
    """Pick the candidate tile (given in descending order) minimizing padding."""
    best_c, best_pad = None, None
    for c in candidates:
        pad = _round_up(n, c) - n
        if best_pad is None or pad < best_pad:
            best_c, best_pad = c, pad
    return best_c


def _kv_block_spec(shape, index_map, deep):
    """K/V BlockSpec with optional 3-deep buffering (guarded for API availability)."""
    if deep and hasattr(pl, "Buffered"):
        try:
            return pl.BlockSpec(shape, index_map, pipeline_mode=pl.Buffered(3))
        except TypeError:
            pass
    return pl.BlockSpec(shape, index_map)


def _flash_attention_kernel(*refs, scale, has_mask, pad_k, tk):
    """One (tb batches, tq queries) x (tk keys) step of online-softmax attention."""
    idx = 0
    if has_mask:
        vl_ref = refs[idx]
        idx += 1
    if pad_k:
        kbias_ref = refs[idx]
        idx += 1
    q_ref, k_ref, v_ref, o_ref, m_sc, l_sc, acc_sc = refs[idx:]

    ki = pl.program_id(2)
    nk = pl.num_programs(2)

    @pl.when(ki == 0)
    def _init():
        m_sc[...] = jnp.full(m_sc.shape, -jnp.inf, jnp.float32)
        l_sc[...] = jnp.zeros(l_sc.shape, jnp.float32)
        acc_sc[...] = jnp.zeros(acc_sc.shape, jnp.float32)

    # scores = Q @ K^T / sqrt(d): NT contraction expressed directly, operands in
    # their (possibly bf16) storage dtype, f32 MXU accumulation.
    s = jnp.einsum("bqd,bkd->bqk", q_ref[...], k_ref[...],
                   preferred_element_type=jnp.float32) * scale      # (tb, tq, tk) f32

    if has_mask:
        # masked_softmax semantics: key positions >= valid_len get -1e6.
        # Tile offset folded into the small (tb, tq, 1) valid-length tensor.
        col = jax.lax.broadcasted_iota(jnp.int32, s.shape, dimension=2)
        s = jnp.where(col < (vl_ref[...] - ki * tk), s, jnp.float32(-1000000.0))

    if pad_k:
        # Phantom (zero-padded) key columns beyond the real K must never get
        # weight, even for degenerate valid_len == 0 rows: additive -inf bias.
        s = s + kbias_ref[...]                                      # (1, tk) bias

    # online softmax update (all f32)
    m_prev = m_sc[...]
    m_new = jnp.maximum(m_prev, jnp.max(s, axis=-1, keepdims=True))
    alpha = jnp.exp(m_prev - m_new)
    p = jnp.exp(s - m_new)                                          # (tb, tq, tk)
    l_sc[...] = alpha * l_sc[...] + jnp.sum(p, axis=-1, keepdims=True)
    pv = jnp.einsum("bqk,bkd->bqd", p.astype(v_ref.dtype), v_ref[...],
                    preferred_element_type=jnp.float32)             # (tb, tq, Dv)
    acc_sc[...] = alpha * acc_sc[...] + pv
    m_sc[...] = m_new

    @pl.when(ki == nk - 1)
    def _finalize():
        o_ref[...] = (acc_sc[...] * (1.0 / l_sc[...])).astype(o_ref.dtype)


def dot_product_attention(queries, keys, values, valid_lens=None, *,
                          use_bf16_matmul=True):
    """queries (B,Q,D), keys (B,K,D), values (B,K,Dv) -> (B,Q,Dv).

    valid_lens: None, (B,) per-batch lengths, or (B,Q) per-query lengths
    (mirrors masked_softmax / repeat_interleave in the PyTorch reference).
    """
    B, Q, D = queries.shape
    _, K, _ = keys.shape
    Dv = values.shape[-1]
    in_dtype = queries.dtype
    scale = 1.0 / math.sqrt(D)   # scale from the ORIGINAL feature dim

    has_mask = valid_lens is not None
    compute_dtype = (jnp.bfloat16
                     if (use_bf16_matmul and in_dtype == jnp.float32)
                     else in_dtype)
    c_isize = jnp.dtype(compute_dtype).itemsize
    o_isize = jnp.dtype(in_dtype).itemsize

    # --- tile sizes: full feature dims (no padding), large Q tiles for K/V reuse ---
    if Q <= 512:
        tq, q_pad = Q, Q
    else:
        tq = _best_tile(Q, (512, 384, 256, 128))
        q_pad = _round_up(Q, tq)
    if K <= 512:
        tk, k_pad = K, K
    else:
        tk = _best_tile(K, (512, 384, 256, 128))
        k_pad = _round_up(K, tk)
    pad_k = k_pad > K

    # batch packing: amortize per-step overhead for tiny Q, but keep the parallel
    # grid (batch x q-tiles) >= 2 when B >= 2 so v7x's 2 TensorCores both work.
    tb = 1
    tb_cap = max(1, min(8, 256 // max(tq, 1), B))
    for cand in range(tb_cap, 0, -1):
        if B % cand != 0:
            continue
        if B >= 2 and (B // cand) * (q_pad // tq) < 2:
            continue
        tb = cand
        break

    n_k_tiles = k_pad // tk
    use_deep_kv = n_k_tiles >= 4 and hasattr(pl, "Buffered")
    kv_bufs = 3 if use_deep_kv else 2

    # --- VMEM budget: 75% of physical capacity (48 MiB on v7x, 96 MiB on v5e/v6e) ---
    try:
        info = pltpu.get_tpu_info()
        vmem_cap = int(getattr(info, "vmem_capacity_bytes", 64 * 1024 * 1024))
    except Exception:
        vmem_cap = 64 * 1024 * 1024          # conservative (v7x per-TC)
    vmem_budget = int(vmem_cap * 0.75)

    def _estimate(tb_, tq_, tk_, bufs):
        d_eff, dv_eff = _round_up(D, 128), _round_up(Dv, 128)   # lane padding in VMEM
        b = 2 * tb_ * tq_ * d_eff * c_isize                     # Q tiles (double-buffered)
        b += bufs * tb_ * tk_ * d_eff * c_isize                 # K tiles
        b += bufs * tb_ * tk_ * dv_eff * c_isize                # V tiles
        b += 2 * tb_ * tq_ * dv_eff * o_isize                   # out tiles
        b += 2 * tb_ * tq_ * 128 * 4                            # valid-lens tile
        b += tb_ * tq_ * (2 * 128 + dv_eff) * 4                 # m / l / acc scratch
        return b

    while _estimate(tb, tq, tk, kv_bufs) > vmem_budget:
        if kv_bufs > 2:
            kv_bufs, use_deep_kv = 2, False
        elif tb > 1:
            tb = 1
        elif tk > 128:
            tk = max(128, _round_up(tk // 2, 128))
            k_pad = _round_up(K, tk)
            pad_k = k_pad > K
        elif tq > 128:
            tq = max(128, _round_up(tq // 2, 128))
            q_pad = _round_up(Q, tq)
        else:
            break
    n_k_tiles = k_pad // tk
    use_deep_kv = use_deep_kv and n_k_tiles >= 4

    vmem_limit = int(min(vmem_budget,
                         max(32 * 1024 * 1024,
                             int(1.5 * _estimate(tb, tq, tk, kv_bufs)) + (4 << 20))))

    # --- pad sequence dims only (feature dims stay at their true size) ---
    def _pad_rows(x, rows, dtype):
        pr = rows - x.shape[1]
        if pr:
            x = jnp.pad(x, ((0, 0), (0, pr), (0, 0)))
        return x.astype(dtype)

    qp = _pad_rows(queries, q_pad, compute_dtype)
    kp = _pad_rows(keys, k_pad, compute_dtype)
    vp = _pad_rows(values, k_pad, compute_dtype)

    inputs = []
    in_specs = []

    if has_mask:
        vl = jnp.asarray(valid_lens).astype(jnp.int32)
        if vl.ndim == 1:
            row_vl = jnp.broadcast_to(vl[:, None], (B, Q))
        else:
            row_vl = vl.reshape(B, Q)
        if q_pad > Q:
            row_vl = jnp.pad(row_vl, ((0, 0), (0, q_pad - Q)), constant_values=K)
        vlp = row_vl.reshape(B, q_pad, 1)
        inputs.append(vlp)
        in_specs.append(pl.BlockSpec((tb, tq, 1), lambda b, qi, ki: (b, qi, 0)))

    if pad_k:
        kbias = jnp.where(jnp.arange(k_pad) < K,
                          jnp.float32(0.0), jnp.float32(-jnp.inf)).reshape(1, k_pad)
        inputs.append(kbias)
        in_specs.append(pl.BlockSpec((1, tk), lambda b, qi, ki: (0, ki)))

    inputs += [qp, kp, vp]
    in_specs += [
        pl.BlockSpec((tb, tq, D), lambda b, qi, ki: (b, qi, 0)),                 # Q
        _kv_block_spec((tb, tk, D), lambda b, qi, ki: (b, ki, 0), use_deep_kv),  # K
        _kv_block_spec((tb, tk, Dv), lambda b, qi, ki: (b, ki, 0), use_deep_kv), # V
    ]

    kernel = functools.partial(_flash_attention_kernel, scale=scale,
                               has_mask=has_mask, pad_k=pad_k, tk=tk)

    grid = (B // tb, q_pad // tq, k_pad // tk)

    out = pl.pallas_call(
        kernel,
        out_shape=jax.ShapeDtypeStruct((B, q_pad, Dv), in_dtype),
        grid_spec=pltpu.PrefetchScalarGridSpec(
            num_scalar_prefetch=0,
            grid=grid,
            in_specs=in_specs,
            out_specs=pl.BlockSpec((tb, tq, Dv), lambda b, qi, ki: (b, qi, 0)),
            scratch_shapes=[
                pltpu.VMEM((tb, tq, 1), jnp.float32),     # running max m
                pltpu.VMEM((tb, tq, 1), jnp.float32),     # running denom l
                pltpu.VMEM((tb, tq, Dv), jnp.float32),    # output accumulator
            ],
        ),
        compiler_params=pltpu.CompilerParams(
            dimension_semantics=("parallel", "parallel", "arbitrary"),
            vmem_limit_bytes=vmem_limit,
        ),
    )(*inputs)

    # TODO(synk): nn.Dropout is identity in eval mode; training-mode dropout not applied.
    # TODO(synk): attention_weights side-output (module attribute) is not materialized.
    # TODO(synk): tiny-Q decode shapes (M=8) underuse the MXU; folding batch into the
    #             matmul M dimension for the per-batch-mask case is a possible follow-up.
    if q_pad > Q:
        out = out[:, :Q, :]
    return out


def _reference(queries, keys, values, valid_lens):
    d = queries.shape[-1]
    q32 = queries.astype(jnp.float32)
    k32 = keys.astype(jnp.float32)
    v32 = values.astype(jnp.float32)
    scores = jnp.einsum("bqd,bkd->bqk", q32, k32) / math.sqrt(d)
    if valid_lens is not None:
        if valid_lens.ndim == 1:
            vl = valid_lens[:, None, None]
        else:
            vl = valid_lens[:, :, None]
        col = jnp.arange(scores.shape[-1])[None, None, :]
        scores = jnp.where(col < vl, scores, -1000000.0)
    probs = jax.nn.softmax(scores, axis=-1)
    return jnp.einsum("bqk,bkd->bqd", probs, v32)


if __name__ == "__main__":
    key = jax.random.PRNGKey(0)
    k1, k2, k3 = jax.random.split(key, 3)

    B, Q, K, D, Dv = 2, 8, 8, 32, 32
    queries = jax.random.normal(k1, (B, Q, D), dtype=jnp.float32)
    keys_ = jax.random.normal(k2, (B, K, D), dtype=jnp.float32)
    values = jax.random.normal(k3, (B, K, Dv), dtype=jnp.float32)
    valid_lens = jnp.array([3, 6], dtype=jnp.int32)

    # 1-D (per-batch) valid lens, exact f32 matmul path
    out = jax.block_until_ready(
        dot_product_attention(queries, keys_, values, valid_lens, use_bf16_matmul=False))
    ref = _reference(queries, keys_, values, valid_lens)
    assert out.shape == (B, Q, Dv)
    assert jnp.allclose(out, ref, atol=2e-3, rtol=2e-3), "mismatch (1-D valid_lens, f32)"

    # same, default bf16-MXU path for f32 inputs
    out_b = jax.block_until_ready(dot_product_attention(queries, keys_, values, valid_lens))
    assert jnp.allclose(out_b, ref, atol=3e-2, rtol=3e-2), "mismatch (bf16 MXU path)"

    # no masking (no-mask kernel variant, skips the mask VPU work entirely)
    out2 = jax.block_until_ready(
        dot_product_attention(queries, keys_, values, None, use_bf16_matmul=False))
    ref2 = _reference(queries, keys_, values, None)
    assert jnp.allclose(out2, ref2, atol=2e-3, rtol=2e-3), "mismatch (no mask)"

    # 2-D (per-query) valid lens, as supported by the PyTorch reference
    vl2d = jnp.array([[1, 2, 3, 4, 5, 6, 7, 8],
                      [8, 7, 6, 5, 4, 3, 2, 1]], dtype=jnp.int32)
    out3 = jax.block_until_ready(
        dot_product_attention(queries, keys_, values, vl2d, use_bf16_matmul=False))
    ref3 = _reference(queries, keys_, values, vl2d)
    assert jnp.allclose(out3, ref3, atol=2e-3, rtol=2e-3), "mismatch (2-D valid_lens)"

    # bf16 inputs exercise the MXU-native low-precision path (f32 softmax kept)
    qb, kb, vb = (x.astype(jnp.bfloat16) for x in (queries, keys_, values))
    out4 = jax.block_until_ready(dot_product_attention(qb, kb, vb, valid_lens))
    ref4 = _reference(qb, kb, vb, valid_lens)
    assert jnp.allclose(out4.astype(jnp.float32), ref4, atol=1e-1, rtol=1e-1), "mismatch (bf16)"

    # medium shape: multi-tile online-softmax reduction (5 K tiles, deep K/V buffering)
    B2, Q2, K2, D2, Dv2 = 2, 96, 640, 64, 64
    kk = jax.random.split(jax.random.PRNGKey(1), 3)
    q2 = jax.random.normal(kk[0], (B2, Q2, D2), dtype=jnp.float32)
    k2_ = jax.random.normal(kk[1], (B2, K2, D2), dtype=jnp.float32)
    v2 = jax.random.normal(kk[2], (B2, K2, Dv2), dtype=jnp.float32)
    vl2 = jnp.array([600, 17], dtype=jnp.int32)
    out5 = jax.block_until_ready(
        dot_product_attention(q2, k2_, v2, vl2, use_bf16_matmul=False))
    ref5 = _reference(q2, k2_, v2, vl2)
    assert jnp.allclose(out5, ref5, atol=2e-3, rtol=2e-3), "mismatch (multi K-tile)"

    # odd K: padded phantom keys masked via the -inf bias, including a valid_len==0 row
    K3 = 650
    kk3 = jax.random.split(jax.random.PRNGKey(2), 3)
    q3 = jax.random.normal(kk3[0], (B2, Q2, D2), dtype=jnp.float32)
    k3_ = jax.random.normal(kk3[1], (B2, K3, D2), dtype=jnp.float32)
    v3 = jax.random.normal(kk3[2], (B2, K3, Dv2), dtype=jnp.float32)
    vl3 = jnp.array([0, 300], dtype=jnp.int32)
    out6 = jax.block_until_ready(
        dot_product_attention(q3, k3_, v3, vl3, use_bf16_matmul=False))
    ref6 = _reference(q3, k3_, v3, vl3)
    assert jnp.allclose(out6, ref6, atol=2e-3, rtol=2e-3), "mismatch (padded K)"

    print("KERNEL_OK")
</pallas_src>

<mosaic_0001>
module attributes {stable_mosaic.version = 11 : i64} {
  func.func @_flash_attention_kernel(%arg0: i32, %arg1: i32, %arg2: i32, %arg3: memref<1x8x1xi32, #tpu.memory_space<vmem>>, %arg4: memref<1x8x32xf32, #tpu.memory_space<vmem>>, %arg5: memref<1x8x32xf32, #tpu.memory_space<vmem>>, %arg6: memref<1x8x32xf32, #tpu.memory_space<vmem>>, %arg7: memref<1x8x32xf32, #tpu.memory_space<vmem>>, %arg8: memref<1x8x1xf32, #tpu.memory_space<vmem>>, %arg9: memref<1x8x1xf32, #tpu.memory_space<vmem>>, %arg10: memref<1x8x32xf32, #tpu.memory_space<vmem>>) attributes {dimension_semantics = [#tpu.dimension_semantics<parallel>, #tpu.dimension_semantics<parallel>, #tpu.dimension_semantics<arbitrary>], iteration_bounds = array<i64: 2, 1, 1>, scalar_prefetch = 0 : i64, scratch_operands = 3 : i64, tpu.core_type = #tpu.core_type<tc>, window_params = [{transform_indices = @transform_0, window_bounds = array<i64: 1, 8, 1>}, {transform_indices = @transform_1, window_bounds = array<i64: 1, 8, 32>}, {transform_indices = @transform_2, window_bounds = array<i64: 1, 8, 32>}, {transform_indices = @transform_3, window_bounds = array<i64: 1, 8, 32>}, {transform_indices = @transform_4, window_bounds = array<i64: 1, 8, 32>}]} {
    %c0_i32 = arith.constant 0 : i32
    %0 = arith.cmpi eq, %arg2, %c0_i32 : i32
    %1 = arith.extui %0 : i1 to i32
    %c0_i32_0 = arith.constant 0 : i32
    %2 = arith.cmpi ne, %1, %c0_i32_0 : i32
    scf.if %2 {
      %cst_37 = arith.constant 0xFF800000 : f32
      %43 = vector.broadcast %cst_37 : f32 to vector<1x8x1xf32>
      %c0_38 = arith.constant 0 : index
      %c0_39 = arith.constant 0 : index
      %c0_40 = arith.constant 0 : index
      %44 = vector.load %arg8[%c0_38, %c0_39, %c0_40] : memref<1x8x1xf32, #tpu.memory_space<vmem>>, vector<1x8x1xf32>
      tpu.vector_store %arg8[%c0_38, %c0_39, %c0_40], %43 {strides = array<i32>} : memref<1x8x1xf32, #tpu.memory_space<vmem>>, vector<1x8x1xf32>,
      %cst_41 = arith.constant 0.000000e+00 : f32
      %45 = vector.broadcast %cst_41 : f32 to vector<1x8x1xf32>
      %c0_42 = arith.constant 0 : index
      %c0_43 = arith.constant 0 : index
      %c0_44 = arith.constant 0 : index
      %46 = vector.load %arg9[%c0_42, %c0_43, %c0_44] : memref<1x8x1xf32, #tpu.memory_space<vmem>>, vector<1x8x1xf32>
      tpu.vector_store %arg9[%c0_42, %c0_43, %c0_44], %45 {strides = array<i32>} : memref<1x8x1xf32, #tpu.memory_space<vmem>>, vector<1x8x1xf32>,
      %cst_45 = arith.constant 0.000000e+00 : f32
      %47 = vector.broadcast %cst_45 : f32 to vector<1x8x32xf32>
      %c0_46 = arith.constant 0 : index
      %c0_47 = arith.constant 0 : index
      %c0_48 = arith.constant 0 : index
      %48 = vector.load %arg10[%c0_46, %c0_47, %c0_48] : memref<1x8x32xf32, #tpu.memory_space<vmem>>, vector<1x8x32xf32>
      tpu.vector_store %arg10[%c0_46, %c0_47, %c0_48], %47 {strides = array<i32>} : memref<1x8x32xf32, #tpu.memory_space<vmem>>, vector<1x8x32xf32>,
    } else {
    }
    %c0 = arith.constant 0 : index
    %c0_1 = arith.constant 0 : index
    %c0_2 = arith.constant 0 : index
    %3 = vector.load %arg4[%c0, %c0_1, %c0_2] : memref<1x8x32xf32, #tpu.memory_space<vmem>>, vector<1x8x32xf32>
    %c0_3 = arith.constant 0 : index
    %c0_4 = arith.constant 0 : index
    %c0_5 = arith.constant 0 : index
    %4 = vector.load %arg5[%c0_3, %c0_4, %c0_5] : memref<1x8x32xf32, #tpu.memory_space<vmem>>, vector<1x8x32xf32>
    "tpu.trace_start"() <{level = 10 : i32, message = "bqd,bkd->bqk"}> : () -> ()
    %cst = arith.constant dense<0.000000e+00> : vector<1x8x8xf32>
    %5 = tpu.matmul %3, %4, %cst {dimension_numbers = #tpu.dot_dimension_numbers<[2], [2], [1], [1], [0, 0, 0, 1, 1, 1], [0], [0]>} : vector<1x8x32xf32>, vector<1x8x32xf32>, vector<1x8x8xf32> -> vector<1x8x8xf32>
    "tpu.trace_stop"() : () -> ()
    %cst_6 = arith.constant 0.176776692 : f32
    %6 = vector.broadcast %cst_6 : f32 to vector<1x8x8xf32>
    %7 = arith.mulf %5, %6 : vector<1x8x8xf32>
    %8 = tpu.iota {dimensions = array<i32: 2>} : vector<1x8x8xi32>
    %c0_7 = arith.constant 0 : index
    %c0_8 = arith.constant 0 : index
    %c0_9 = arith.constant 0 : index
    %9 = vector.load %arg3[%c0_7, %c0_8, %c0_9] : memref<1x8x1xi32, #tpu.memory_space<vmem>>, vector<1x8x1xi32>
    %c8_i32 = arith.constant 8 : i32
    %10 = arith.muli %arg2, %c8_i32 : i32
    %11 = vector.broadcast %10 : i32 to vector<1x8x1xi32>
    %12 = arith.subi %9, %11 : vector<1x8x1xi32>
    %13 = vector.broadcast %12 : vector<1x8x1xi32> to vector<1x8x8xi32>
    %14 = arith.cmpi slt, %8, %13 : vector<1x8x8xi32>
    %cst_10 = arith.constant -1.000000e+06 : f32
    %15 = vector.broadcast %cst_10 : f32 to vector<1x8x8xf32>
    %16 = arith.select %14, %7, %15 : vector<1x8x8xi1>, vector<1x8x8xf32>
    %c0_11 = arith.constant 0 : index
    %c0_12 = arith.constant 0 : index
    %c0_13 = arith.constant 0 : index
    %17 = vector.load %arg8[%c0_11, %c0_12, %c0_13] : memref<1x8x1xf32, #tpu.memory_space<vmem>>, vector<1x8x1xf32>
    %cst_14 = arith.constant dense<0xFF800000> : vector<1x8xf32>
    %18 = vector.multi_reduction <maximumf>, %16, %cst_14 [2] : vector<1x8x8xf32> to vector<1x8xf32>
    %19 = vector.shape_cast %18 : vector<1x8xf32> to vector<1x8x1xf32>
    %20 = arith.maximumf %17, %19 : vector<1x8x1xf32>
    %21 = arith.subf %17, %20 : vector<1x8x1xf32>
    %22 = math.exp %21 : vector<1x8x1xf32>
    %23 = vector.broadcast %20 : vector<1x8x1xf32> to vector<1x8x8xf32>
    %24 = arith.subf %16, %23 : vector<1x8x8xf32>
    %25 = math.exp %24 : vector<1x8x8xf32>
    %c0_15 = arith.constant 0 : index
    %c0_16 = arith.constant 0 : index
    %c0_17 = arith.constant 0 : index
    %26 = vector.load %arg9[%c0_15, %c0_16, %c0_17] : memref<1x8x1xf32, #tpu.memory_space<vmem>>, vector<1x8x1xf32>
    %27 = arith.mulf %22, %26 : vector<1x8x1xf32>
    %cst_18 = arith.constant dense<0.000000e+00> : vector<1x8xf32>
    %28 = vector.multi_reduction <add>, %25, %cst_18 [2] : vector<1x8x8xf32> to vector<1x8xf32>
    %29 = vector.shape_cast %28 : vector<1x8xf32> to vector<1x8x1xf32>
    %30 = arith.addf %27, %29 : vector<1x8x1xf32>
    %c0_19 = arith.constant 0 : index
    %c0_20 = arith.constant 0 : index
    %c0_21 = arith.constant 0 : index
    %31 = vector.load %arg9[%c0_19, %c0_20, %c0_21] : memref<1x8x1xf32, #tpu.memory_space<vmem>>, vector<1x8x1xf32>
    tpu.vector_store %arg9[%c0_19, %c0_20, %c0_21], %30 {strides = array<i32>} : memref<1x8x1xf32, #tpu.memory_space<vmem>>, vector<1x8x1xf32>,
    %c0_22 = arith.constant 0 : index
    %c0_23 = arith.constant 0 : index
    %c0_24 = arith.constant 0 : index
    %32 = vector.load %arg6[%c0_22, %c0_23, %c0_24] : memref<1x8x32xf32, #tpu.memory_space<vmem>>, vector<1x8x32xf32>
    "tpu.trace_start"() <{level = 10 : i32, message = "bqk,bkd->bqd"}> : () -> ()
    %cst_25 = arith.constant dense<0.000000e+00> : vector<1x8x32xf32>
    %33 = tpu.matmul %25, %32, %cst_25 {dimension_numbers = #tpu.dot_dimension_numbers<[2], [1], [1], [2], [0, 0, 0, 1, 1, 2], [0], [0]>} : vector<1x8x8xf32>, vector<1x8x32xf32>, vector<1x8x32xf32> -> vector<1x8x32xf32>
    "tpu.trace_stop"() : () -> ()
    %c0_26 = arith.constant 0 : index
    %c0_27 = arith.constant 0 : index
    %c0_28 = arith.constant 0 : index
    %34 = vector.load %arg10[%c0_26, %c0_27, %c0_28] : memref<1x8x32xf32, #tpu.memory_space<vmem>>, vector<1x8x32xf32>
    %35 = vector.broadcast %22 : vector<1x8x1xf32> to vector<1x8x32xf32>
    %36 = arith.mulf %35, %34 : vector<1x8x32xf32>
    %37 = arith.addf %36, %33 : vector<1x8x32xf32>
    %c0_29 = arith.constant 0 : index
    %c0_30 = arith.constant 0 : index
    %c0_31 = arith.constant 0 : index
    %38 = vector.load %arg10[%c0_29, %c0_30, %c0_31] : memref<1x8x32xf32, #tpu.memory_space<vmem>>, vector<1x8x32xf32>
    tpu.vector_store %arg10[%c0_29, %c0_30, %c0_31], %37 {strides = array<i32>} : memref<1x8x32xf32, #tpu.memory_space<vmem>>, vector<1x8x32xf32>,
    %c0_32 = arith.constant 0 : index
    %c0_33 = arith.constant 0 : index
    %c0_34 = arith.constant 0 : index
    %39 = vector.load %arg8[%c0_32, %c0_33, %c0_34] : memref<1x8x1xf32, #tpu.memory_space<vmem>>, vector<1x8x1xf32>
    tpu.vector_store %arg8[%c0_32, %c0_33, %c0_34], %20 {strides = array<i32>} : memref<1x8x1xf32, #tpu.memory_space<vmem>>, vector<1x8x1xf32>,
    %c0_i32_35 = arith.constant 0 : i32
    %40 = arith.cmpi eq, %arg2, %c0_i32_35 : i32
    %41 = arith.extui %40 : i1 to i32
    %c0_i32_36 = arith.constant 0 : i32
    %42 = arith.cmpi ne, %41, %c0_i32_36 : i32
    scf.if %42 {
      %c0_37 = arith.constant 0 : index
      %c0_38 = arith.constant 0 : index
      %c0_39 = arith.constant 0 : index
      %43 = vector.load %arg10[%c0_37, %c0_38, %c0_39] : memref<1x8x32xf32, #tpu.memory_space<vmem>>, vector<1x8x32xf32>
      %c0_40 = arith.constant 0 : index
      %c0_41 = arith.constant 0 : index
      %c0_42 = arith.constant 0 : index
      %44 = vector.load %arg9[%c0_40, %c0_41, %c0_42] : memref<1x8x1xf32, #tpu.memory_space<vmem>>, vector<1x8x1xf32>
      %cst_43 = arith.constant 1.000000e+00 : f32
      %45 = vector.broadcast %cst_43 : f32 to vector<1x8x1xf32>
      %46 = arith.divf %45, %44 : vector<1x8x1xf32>
      %47 = vector.broadcast %46 : vector<1x8x1xf32> to vector<1x8x32xf32>
      %48 = arith.mulf %43, %47 : vector<1x8x32xf32>
      %c0_44 = arith.constant 0 : index
      %c0_45 = arith.constant 0 : index
      %c0_46 = arith.constant 0 : index
      %49 = vector.load %arg7[%c0_44, %c0_45, %c0_46] : memref<1x8x32xf32, #tpu.memory_space<vmem>>, vector<1x8x32xf32>
      tpu.vector_store %arg7[%c0_44, %c0_45, %c0_46], %48 {strides = array<i32>} : memref<1x8x32xf32, #tpu.memory_space<vmem>>, vector<1x8x32xf32>,
    } else {
    }
    return
  }
  func.func @transform_0(%arg0: i32, %arg1: i32, %arg2: i32) -> (i32, i32, i32) {
    %c0_i32 = arith.constant 0 : i32
    %c0_i32_0 = arith.constant 0 : i32
    return %arg0, %arg1, %c0_i32 : i32, i32, i32
  }
  func.func @transform_1(%arg0: i32, %arg1: i32, %arg2: i32) -> (i32, i32, i32) {
    %c0_i32 = arith.constant 0 : i32
    %c0_i32_0 = arith.constant 0 : i32
    return %arg0, %arg1, %c0_i32 : i32, i32, i32
  }
  func.func @transform_2(%arg0: i32, %arg1: i32, %arg2: i32) -> (i32, i32, i32) {
    %c0_i32 = arith.constant 0 : i32
    %c0_i32_0 = arith.constant 0 : i32
    return %arg0, %arg2, %c0_i32 : i32, i32, i32
  }
  func.func @transform_3(%arg0: i32, %arg1: i32, %arg2: i32) -> (i32, i32, i32) {
    %c0_i32 = arith.constant 0 : i32
    %c0_i32_0 = arith.constant 0 : i32
    return %arg0, %arg2, %c0_i32 : i32, i32, i32
  }
  func.func @transform_4(%arg0: i32, %arg1: i32, %arg2: i32) -> (i32, i32, i32) {
    %c0_i32 = arith.constant 0 : i32
    %c0_i32_0 = arith.constant 0 : i32
    return %arg0, %arg1, %c0_i32 : i32, i32, i32
  }
}

</mosaic_0001>

<llo_original>
// kernel: tpu_custom_call.1
$region0: #{tpu_custom_call.1}
  #allocation0 [shape = 'u32[]', space=smem, size = 0x4, offset = 0x4, fixed_abs, tag = 'smem constant byte address 0x4 - core index']
  #allocation1 [shape = 'u32[144,128]{1,0:T(1,128)}', space=vmem, size = 0x12000, scoped, tag = 'internal scratch']
  #allocation2 [shape = 'f32[1,8,1]{2,1,0:T(8,128)}', space=vmem, size = 0x1000, scoped, tag = 'scratch operand']
  #allocation3 [shape = 'f32[1,8,1]{2,1,0:T(8,128)}', space=vmem, size = 0x1000, scoped, tag = 'scratch operand']
  #allocation4 [shape = 'f32[1,8,32]{2,1,0:T(8,128)}', space=vmem, size = 0x1000, scoped, tag = 'scratch operand']
  %s0 = inlined_call_operand.vmem [shape: s32[2,8,1], index: 0, kind: input, shape index: {}]
  %s1 = inlined_call_operand.vmem [shape: f32[2,8,32], index: 1, kind: input, shape index: {}]
  %s2 = inlined_call_operand.hbm [shape: f32[2,8,32], index: 2, kind: input, shape index: {}]
  %s3 = inlined_call_operand.hbm [shape: f32[2,8,32], index: 3, kind: input, shape index: {}]
  %s4 = inlined_call_operand.hbm [shape: f32[2,8,32], index: 4, kind: output, shape index: {}]
  %s5 = sld [smem:[#allocation0]]
  $region65: #{tpu_custom_call.1} parent=0
    _
  %s7 = ssub.s32 1, %s5
  %s8 = scalar_select 0, %s7, %s5
  $region1: #{tpu_custom_call.1} parent=0
    #allocation5 [shape = 'u8[8192]{0}', space=vmem, size = 0x2000, scoped, tag = 'input window, operand 2']
    #allocation6 [shape = 's32[2]{0}', space=sflag, size = 0x8, scoped, tag = 'scoped memory for tpu_custom_call.1']
    #allocation7 [shape = 's32[2]{0}', space=sflag, size = 0x8, scoped, tag = 'scoped memory for tpu_custom_call.1']
    #allocation8 [shape = 'u8[8192]{0}', space=vmem, size = 0x2000, scoped, tag = 'input window, operand 3']
    #allocation9 [shape = 's32[2]{0}', space=sflag, size = 0x8, scoped, tag = 'scoped memory for tpu_custom_call.1']
    #allocation10 [shape = 'u8[8192]{0}', space=vmem, size = 0x2000, scoped, tag = 'output window, operand 0']
    %9 = vsyncpa [#allocation6], 0
    %s10 = scalar_lea.sflag [#allocation6], 1
    %11 = vsyncpa %s10, 0
    %12 = vsyncpa [#allocation9], 0
    %s13 = scalar_lea.sflag [#allocation9], 1
    %14 = vsyncpa %s13, 0
    %15 = vsyncpa [#allocation7], 0
    %s16 = scalar_lea.sflag [#allocation7], 1
    %17 = vsyncpa %s16, 0
    loop: start=0, step=1, limit=4
    $region2: #{tpu_custom_call.1} parent=1 // loop_pre_header
      _
    $region3: #{tpu_custom_call.1} parent=1 // loop_header
      %s19 = sphi 0, %s23
      %p20 = scmp.ge.s32.totalorder %s19, 4
      %s26 = sphi 0, %s45
      %s27 = sphi 0, %s41
      %s28 = sphi 0, %s37
      %s29 = sphi 0, %s26
      %s30 = sphi 0, %s27
      %s31 = sphi 0, %s28
      %s32 = sphi 0, %s29
      %s33 = sphi 0, %s30
      %s34 = sphi 0, %s31
      %s50 = sphi 0, %s52
      %s53 = sphi 0, %s50
      %s54 = sphi 0, %s53
      %s70 = sphi 0, %s54
      %s78 = sphi 0, %s80
      %s81 = sphi 0, %s78
      %s82 = sphi 0, %s81
      %s98 = sphi 0, %s82
      %s106 = sphi 0, %s108
      %s109 = sphi 0, %s106
      %s110 = sphi 0, %s109
      %s126 = sphi 0, %s110
      %s134 = sphi 0, %s136
      %s137 = sphi 0, %s134
      %s138 = sphi 0, %s137
      %s154 = sphi 0, %s138
      %s162 = sphi 0, %s164
      %s165 = sphi 0, %s162
      %s166 = sphi 0, %s165
      %s182 = sphi 0, %s166
    $region4: #{tpu_custom_call.1} parent=1 // loop_header_branch
      %22 = sbr.rel (%p20) target = $region8
    $region5: #{tpu_custom_call.1} parent=1 // loop_body
      %s24 = ssub.s32 %s19, 1
      %s25 = ssub.s32 %s19, 2
      %s35 = sadd.s32 1, %s28
      %p36 = scmp.ge.s32.totalorder %s35, 1
      %s37 = scalar_select %p36, 0, %s35
      %s38 = sadd.s32 1, %s27
      %s39 = scalar_select %p36, %s38, %s27
      %p40 = scmp.ge.s32.totalorder %s39, 1
      %s41 = scalar_select %p40, 0, %s39
      %s42 = sadd.s32 1, %s26
      %s43 = scalar_select %p40, %s42, %s26
      %p44 = scmp.ge.s32.totalorder %s43, 2
      %s45 = scalar_select %p44, 0, %s43
      %s46 = ssub.s32 %s26, %s45
      %s47 = ssub.s32 %s27, %s41
      %s48 = sor.u32 %s46, %s47
      %p49 = scmp.eq.s32.totalorder %s48, 0
      %s51 = sadd.s32 %s50, 1
      %s52 = scalar_select %p49, %s50, %s51
      %p55 = pneg %p49
      %p56 = scmp.eq.s32.totalorder %s19, 1
      %p57 = por %p55, %p56
      %p58 = scmp.ne.s32.totalorder %s50, %s53
      %p59 = scmp.eq.s32.totalorder %s19, 0
      %p60 = por %p58, %p59
      %p61 = scmp.ne.s32.totalorder %s50, %s53
      %p62 = scmp.eq.s32.totalorder %s24, 1
      %p63 = por %p61, %p62
      %p64 = scmp.ne.s32.totalorder %s53, %s54
      %p65 = scmp.eq.s32.totalorder %s24, 0
      %p66 = por %p64, %p65
      %p67 = scmp.ne.s32.totalorder %s53, %s54
      %p68 = scmp.eq.s32.totalorder %s25, 1
      %p69 = por %p67, %p68
      %p71 = scmp.ne.s32.totalorder %s54, %s70
      %p72 = scmp.eq.s32.totalorder %s25, 0
      %p73 = por %p71, %p72
      %s74 = ssub.s32 %s26, %s45
      %s75 = ssub.s32 %s27, %s41
      %s76 = sor.u32 %s74, %s75
      %p77 = scmp.eq.s32.totalorder %s76, 0
      %s79 = sadd.s32 %s78, 1
      %s80 = scalar_select %p77, %s78, %s79
      %p83 = pneg %p77
      %p84 = scmp.eq.s32.totalorder %s19, 1
      %p85 = por %p83, %p84
      %p86 = scmp.ne.s32.totalorder %s78, %s81
      %p87 = scmp.eq.s32.totalorder %s19, 0
      %p88 = por %p86, %p87
      %p89 = scmp.ne.s32.totalorder %s78, %s81
      %p90 = scmp.eq.s32.totalorder %s24, 1
      %p91 = por %p89, %p90
      %p92 = scmp.ne.s32.totalorder %s81, %s82
      %p93 = scmp.eq.s32.totalorder %s24, 0
      %p94 = por %p92, %p93
      %p95 = scmp.ne.s32.totalorder %s81, %s82
      %p96 = scmp.eq.s32.totalorder %s25, 1
      %p97 = por %p95, %p96
      %p99 = scmp.ne.s32.totalorder %s82, %s98
      %p100 = scmp.eq.s32.totalorder %s25, 0
      %p101 = por %p99, %p100
      %s102 = ssub.s32 %s26, %s45
      %s103 = ssub.s32 %s28, %s37
      %s104 = sor.u32 %s102, %s103
      %p105 = scmp.eq.s32.totalorder %s104, 0
      %s107 = sadd.s32 %s106, 1
      %s108 = scalar_select %p105, %s106, %s107
      %p111 = pneg %p105
      %p112 = scmp.eq.s32.totalorder %s19, 1
      %p113 = por %p111, %p112
      %p114 = scmp.ne.s32.totalorder %s106, %s109
      %p115 = scmp.eq.s32.totalorder %s19, 0
      %p116 = por %p114, %p115
      %p117 = scmp.ne.s32.totalorder %s106, %s109
      %p118 = scmp.eq.s32.totalorder %s24, 1
      %p119 = por %p117, %p118
      %p120 = scmp.ne.s32.totalorder %s109, %s110
      %p121 = scmp.eq.s32.totalorder %s24, 0
      %p122 = por %p120, %p121
      %p123 = scmp.ne.s32.totalorder %s109, %s110
      %p124 = scmp.eq.s32.totalorder %s25, 1
      %p125 = por %p123, %p124
      %p127 = scmp.ne.s32.totalorder %s110, %s126
      %p128 = scmp.eq.s32.totalorder %s25, 0
      %p129 = por %p127, %p128
      %s130 = ssub.s32 %s26, %s45
      %s131 = ssub.s32 %s28, %s37
      %s132 = sor.u32 %s130, %s131
      %p133 = scmp.eq.s32.totalorder %s132, 0
      %s135 = sadd.s32 %s134, 1
      %s136 = scalar_select %p133, %s134, %s135
      %p139 = pneg %p133
      %p140 = scmp.eq.s32.totalorder %s19, 1
      %p141 = por %p139, %p140
      %p142 = scmp.ne.s32.totalorder %s134, %s137
      %p143 = scmp.eq.s32.totalorder %s19, 0
      %p144 = por %p142, %p143
      %p145 = scmp.ne.s32.totalorder %s134, %s137
      %p146 = scmp.eq.s32.totalorder %s24, 1
      %p147 = por %p145, %p146
      %p148 = scmp.ne.s32.totalorder %s137, %s138
      %p149 = scmp.eq.s32.totalorder %s24, 0
      %p150 = por %p148, %p149
      %p151 = scmp.ne.s32.totalorder %s137, %s138
      %p152 = scmp.eq.s32.totalorder %s25, 1
      %p153 = por %p151, %p152
      %p155 = scmp.ne.s32.totalorder %s138, %s154
      %p156 = scmp.eq.s32.totalorder %s25, 0
      %p157 = por %p155, %p156
      %s158 = ssub.s32 %s26, %s45
      %s159 = ssub.s32 %s27, %s41
      %s160 = sor.u32 %s158, %s159
      %p161 = scmp.eq.s32.totalorder %s160, 0
      %s163 = sadd.s32 %s162, 1
      %s164 = scalar_select %p161, %s162, %s163
      %p167 = pneg %p161
      %p168 = scmp.eq.s32.totalorder %s19, 1
      %p169 = por %p167, %p168
      %p170 = scmp.ne.s32.totalorder %s162, %s165
      %p171 = scmp.eq.s32.totalorder %s19, 0
      %p172 = por %p170, %p171
      %p173 = scmp.ne.s32.totalorder %s162, %s165
      %p174 = scmp.eq.s32.totalorder %s24, 1
      %p175 = por %p173, %p174
      %p176 = scmp.ne.s32.totalorder %s165, %s166
      %p177 = scmp.eq.s32.totalorder %s24, 0
      %p178 = por %p176, %p177
      %p179 = scmp.ne.s32.totalorder %s165, %s166
      %p180 = scmp.eq.s32.totalorder %s25, 1
      %p181 = por %p179, %p180
      %p183 = scmp.ne.s32.totalorder %s166, %s182
      %p184 = scmp.eq.s32.totalorder %s25, 0
      %p185 = por %p183, %p184
      %p186 = scmp.le.s32.totalorder 1, %s19
      %p187 = scmp.lt.s32.totalorder %s19, 3
      %p188 = pnand %p186, %p187
      %p189 = pneg %p188
      // Predicated region
      $region9: #{tpu_custom_call.1} parent=5 // pred_check
        _
      $region10: #{tpu_custom_call.1} parent=5 // pred_check_branch
        %191 = sbr.rel (%p188) target = $region12
      $region11: #{tpu_custom_call.1} parent=5 // pred_region
        %s192 = ssub.s32 %s19, 1
      $region12: #{tpu_custom_call.1} parent=5 // pred_fallthru
        _
      %p193 = scmp.lt.s32.totalorder %s19, 2
      // Predicated region
      $region13: #{tpu_custom_call.1} parent=5 // pred_check
        %p194 = pneg %p193
      $region14: #{tpu_custom_call.1} parent=5 // pred_check_branch
        %196 = sbr.rel (%p194) target = $region16
      $region15: #{tpu_custom_call.1} parent=5 // pred_region
        // Predicated region
        $region17: #{tpu_custom_call.1} parent=15 // pred_check
          %p197 = pneg %p60
        $region18: #{tpu_custom_call.1} parent=15 // pred_check_branch
          %199 = sbr.rel (%p197) target = $region20
        $region19: #{tpu_custom_call.1} parent=15 // pred_region
          %p200 = scmp.lt.s32.totalorder %s26, 1
          %s201 = scalar_select %p200, %s26, 1
          %p202 = scmp.lt.s32.totalorder %s27, 0
          %s203 = scalar_select %p202, %s27, 0
          %s204 = sadd.s32 %s203, %s201
          %s205 = smul.addr %s204, 8
          %s206 = scalar_lea.vmem %s0, %s205
        $region20: #{tpu_custom_call.1} parent=15 // pred_fallthru
          _
        // Predicated region
        $region21: #{tpu_custom_call.1} parent=15 // pred_check
          %p207 = pneg %p88
        $region22: #{tpu_custom_call.1} parent=15 // pred_check_branch
          %209 = sbr.rel (%p207) target = $region24
        $region23: #{tpu_custom_call.1} parent=15 // pred_region
          %p210 = scmp.lt.s32.totalorder %s26, 1
          %s211 = scalar_select %p210, %s26, 1
          %p212 = scmp.lt.s32.totalorder %s27, 0
          %s213 = scalar_select %p212, %s27, 0
          %s214 = sadd.s32 %s213, %s211
          %s215 = smul.addr %s214, 8
          %s216 = scalar_lea.vmem %s1, %s215
        $region24: #{tpu_custom_call.1} parent=15 // pred_fallthru
          _
        // Predicated region
        $region25: #{tpu_custom_call.1} parent=15 // pred_check
          %p217 = pneg %p116
        $region26: #{tpu_custom_call.1} parent=15 // pred_check_branch
          %219 = sbr.rel (%p217) target = $region28
        $region27: #{tpu_custom_call.1} parent=15 // pred_region
          %s220 = sand.u32 %s106, 1
          %s221 = scalar_lea.sflag [#allocation6], %s220
          %s222 = sand.u32 %s106, 1
          %s223 = smul.addr %s222, 8
          %s224 = scalar_lea.vmem [#allocation5], %s223
          %s226 = ssub.s32 128, 128
          %227 = vsyncadd %s221, %s226
          %s228 = sadd.s32 %s28, %s26
          %s229 = smul.addr %s228, 128
          %s230 = scalar_lea.hbm %s2, %s229
          %s232 = sshll.u32 %s224, 4
          %s233 = int_to_ptr.vmem [resolvable:$true] %s232
          %235 = dma.hbm_to_vmem [thread:$0]  %s230, 128, %s233, %s221
        $region28: #{tpu_custom_call.1} parent=15 // pred_fallthru
          _
        // Predicated region
        $region29: #{tpu_custom_call.1} parent=15 // pred_check
          %p236 = pneg %p144
        $region30: #{tpu_custom_call.1} parent=15 // pred_check_branch
          %238 = sbr.rel (%p236) target = $region32
        $region31: #{tpu_custom_call.1} parent=15 // pred_region
          %s239 = sand.u32 %s134, 1
          %s240 = scalar_lea.sflag [#allocation9], %s239
          %s241 = sand.u32 %s134, 1
          %s242 = smul.addr %s241, 8
          %s243 = scalar_lea.vmem [#allocation8], %s242
          %s245 = ssub.s32 128, 128
          %246 = vsyncadd %s240, %s245
          %s247 = sadd.s32 %s28, %s26
          %s248 = smul.addr %s247, 128
          %s249 = scalar_lea.hbm %s3, %s248
          %s251 = sshll.u32 %s243, 4
          %s252 = int_to_ptr.vmem [resolvable:$true] %s251
          %254 = dma.hbm_to_vmem [thread:$0]  %s249, 128, %s252, %s240
        $region32: #{tpu_custom_call.1} parent=15 // pred_fallthru
          _
      $region16: #{tpu_custom_call.1} parent=5 // pred_fallthru
        _
      %p255 = scmp.le.s32.totalorder 1, %s19
      %p256 = scmp.lt.s32.totalorder %s19, 3
      %p257 = pnand %p255, %p256
      %p258 = pneg %p257
      // Predicated region
      $region33: #{tpu_custom_call.1} parent=5 // pred_check
        _
      $region34: #{tpu_custom_call.1} parent=5 // pred_check_branch
        %260 = sbr.rel (%p257) target = $region36
      $region35: #{tpu_custom_call.1} parent=5 // pred_region
        %s261 = ssub.s32 %s19, 1
        %s262 = sand.u32 %s109, 1
        %s263 = scalar_lea.sflag [#allocation6], %s262
        %s264 = sand.u32 %s109, 1
        %s265 = smul.addr %s264, 8
        %s266 = scalar_lea.vmem [#allocation5], %s265
        // Predicated region
        $region37: #{tpu_custom_call.1} parent=35 // pred_check
          %p267 = pneg %p122
        $region38: #{tpu_custom_call.1} parent=35 // pred_check_branch
          %269 = sbr.rel (%p267) target = $region40
        $region39: #{tpu_custom_call.1} parent=35 // pred_region
          %270 = dma.done %s263, 128
        $region40: #{tpu_custom_call.1} parent=35 // pred_fallthru
          _
        %s271 = sand.u32 %s137, 1
        %s272 = scalar_lea.sflag [#allocation9], %s271
        %s273 = sand.u32 %s137, 1
        %s274 = smul.addr %s273, 8
        %s275 = scalar_lea.vmem [#allocation8], %s274
        // Predicated region
        $region41: #{tpu_custom_call.1} parent=35 // pred_check
          %p276 = pneg %p150
        $region42: #{tpu_custom_call.1} parent=35 // pred_check_branch
          %278 = sbr.rel (%p276) target = $region44
        $region43: #{tpu_custom_call.1} parent=35 // pred_region
          %279 = dma.done %s272, 128
        $region44: #{tpu_custom_call.1} parent=35 // pred_fallthru
          _
        %p280 = scmp.lt.s32.totalorder %s29, 1
        %s281 = scalar_select %p280, %s29, 1
        %p282 = scmp.lt.s32.totalorder %s30, 0
        %s283 = scalar_select %p282, %s30, 0
        %s284 = sadd.s32 %s283, %s281
        %s285 = smul.addr %s284, 8
        %s286 = scalar_lea.vmem %s0, %s285
        %p287 = pneg %p66
        %p288 = pneg %p63
        %p289 = scmp.lt.s32.totalorder %s29, 1
        %s290 = scalar_select %p289, %s29, 1
        %p291 = scmp.lt.s32.totalorder %s30, 0
        %s292 = scalar_select %p291, %s30, 0
        %s293 = sadd.s32 %s292, %s290
        %s294 = smul.addr %s293, 8
        %s295 = scalar_lea.vmem %s1, %s294
        %p296 = pneg %p94
        %p297 = pneg %p91
        %s298 = sand.u32 %s109, 1
        %s299 = scalar_lea.sflag [#allocation6], %s298
        %s300 = sand.u32 %s109, 1
        %s301 = smul.addr %s300, 8
        %s302 = scalar_lea.vmem [#allocation5], %s301
        %p303 = pneg %p122
        %p304 = pneg %p119
        %s305 = sand.u32 %s137, 1
        %s306 = scalar_lea.sflag [#allocation9], %s305
        %s307 = sand.u32 %s137, 1
        %s308 = smul.addr %s307, 8
        %s309 = scalar_lea.vmem [#allocation8], %s308
        %p310 = pneg %p150
        %p311 = pneg %p147
        %p312 = pneg %p178
        %p313 = pneg %p175
        %s314 = sand.u32 %s165, 1
        %s315 = scalar_lea.sflag [#allocation7], %s314
        %s316 = sand.u32 %s165, 1
        %s317 = smul.addr %s316, 8
        %s318 = scalar_lea.vmem [#allocation10], %s317
        %p319 = scmp.lt.s32.totalorder %s29, 1
        %s320 = scalar_select %p319, %s29, 1
        %p321 = scmp.lt.s32.totalorder %s30, 0
        %s322 = scalar_select %p321, %s30, 0
        %s323 = sadd.s32 %s322, %s320
        %s324 = smul.addr %s323, 8
        %s325 = scalar_lea.vmem %s0, %s324
        %p326 = scmp.lt.s32.totalorder %s29, 1
        %s327 = scalar_select %p326, %s29, 1
        %p328 = scmp.lt.s32.totalorder %s30, 0
        %s329 = scalar_select %p328, %s30, 0
        %s330 = sadd.s32 %s329, %s327
        %s331 = smul.addr %s330, 8
        %s332 = scalar_lea.vmem %s1, %s331
        %p333 = scmp.eq.s32.totalorder %s31, 0
        // Predicated region
        $region45: #{tpu_custom_call.1} parent=35 // pred_check
          %p334 = pneg %p333
        $region46: #{tpu_custom_call.1} parent=35 // pred_check_branch
          %336 = sbr.rel (%p334) target = $region48
        $region47: #{tpu_custom_call.1} parent=35 // pred_region
          %vm337 = vcmask 7168
          %338 = vst.msk [vmem:[#allocation2] sm:$0xff] %vm337, -inf
          %339 = vst.msk [vmem:[#allocation3] sm:$0xff] %vm337, 0.0
          %vm340 = vcmask 261120
          %341 = vst.msk [vmem:[#allocation4] sm:$0xff] %vm340, 0.0
        $region48: #{tpu_custom_call.1} parent=35 // pred_fallthru
          _
        %v342 = vld [vmem:[%s332] sm:$0xff]
        %v343 = vld [vmem:[%s266] sm:$0xff]
        %vm344 = vcmask 261120
        %v346 = vsel %vm344, %v342, 0
        %v349 = vsel %vm344, %v343, 0
        %351 = vmatprep.subr.mxu0 0.0
        %352 = vmatpush1.xpose.msra.mxu0 %v349
        %353 = vmatprep.subr.mxu0 0.0
        %354 = vmatpush1.xpose.msra.mxu0 0.0
        %355 = vmatprep.subr.mxu0 0.0
        %356 = vmatpush1.xpose.msra.mxu0 0.0
        %357 = vmatprep.subr.mxu0 0.0
        %358 = vmatpush1.xpose.msra.mxu0 0.0
        %359 = vmatprep.subr.mxu0 0.0
        %360 = vmatpush1.xpose.msra.mxu0 0.0
        %361 = vmatprep.subr.mxu0 0.0
        %362 = vmatpush1.xpose.msra.mxu0 0.0
        %363 = vmatprep.subr.mxu0 0.0
        %364 = vmatpush1.xpose.msra.mxu0 0.0
        %365 = vmatprep.subr.mxu0 0.0
        %366 = vmatpush1.xpose.msra.mxu0 0.0
        %367 = vmatprep.subr.mxu0 0.0
        %368 = vmatpush1.xpose.msra.mxu0 0.0
        %369 = vmatprep.subr.mxu0 0.0
        %370 = vmatpush1.xpose.msra.mxu0 0.0
        %371 = vmatprep.subr.mxu0 0.0
        %372 = vmatpush1.xpose.msra.mxu0 0.0
        %373 = vmatprep.subr.mxu0 0.0
        %374 = vmatpush1.xpose.msra.mxu0 0.0
        %375 = vmatprep.subr.mxu0 0.0
        %376 = vmatpush1.xpose.msra.mxu0 0.0
        %377 = vmatprep.subr.mxu0 0.0
        %378 = vmatpush1.xpose.msra.mxu0 0.0
        %379 = vmatprep.subr.mxu0 0.0
        %380 = vmatpush1.xpose.msra.mxu0 0.0
        %381 = vmatprep.subr.mxu0 0.0
        %382 = vmatpush1.xpose.msra.mxu0 0.0
        %383 = vmatprep.subr.mxu0 0.0
        %384 = vmatpush1.xpose.msra.mxu0 0.0
        %385 = vmatprep.subr.mxu0 0.0
        %386 = vmatpush1.xpose.msra.mxu0 0.0
        %387 = vmatprep.subr.mxu0 0.0
        %388 = vmatpush1.xpose.msra.mxu0 0.0
        %389 = vmatprep.subr.mxu0 0.0
        %390 = vmatpush1.xpose.msra.mxu0 0.0
        %391 = vmatprep.subr.mxu0 0.0
        %392 = vmatpush1.xpose.msra.mxu0 0.0
        %393 = vmatprep.subr.mxu0 0.0
        %394 = vmatpush1.xpose.msra.mxu0 0.0
        %395 = vmatprep.subr.mxu0 0.0
        %396 = vmatpush1.xpose.msra.mxu0 0.0
        %397 = vmatprep.subr.mxu0 0.0
        %398 = vmatpush1.xpose.msra.mxu0 0.0
        %399 = vmatprep.subr.mxu0 0.0
        %400 = vmatpush1.xpose.msra.mxu0 0.0
        %401 = vmatprep.subr.mxu0 0.0
        %402 = vmatpush1.xpose.msra.mxu0 0.0
        %403 = vmatprep.subr.mxu0 0.0
        %404 = vmatpush1.xpose.msra.mxu0 0.0
        %405 = vmatprep.subr.mxu0 0.0
        %406 = vmatpush1.xpose.msra.mxu0 0.0
        %407 = vmatprep.subr.mxu0 0.0
        %408 = vmatpush1.xpose.msra.mxu0 0.0
        %409 = vmatprep.subr.mxu0 0.0
        %410 = vmatpush1.xpose.msra.mxu0 0.0
        %411 = vmatprep.subr.mxu0 0.0
        %412 = vmatpush1.xpose.msra.mxu0 0.0
        %413 = vmatprep.subr.mxu0 0.0
        %414 = vmatpush1.xpose.msra.mxu0 0.0
        %415 = vmatprep.mubr.f32.mxu0 0.0
        %416 = vmatmul.mubr.f32.gmra.mrb[0].mxu0 %v346
        %v417 = vpop.f32.mrb[0].mxu0
        %v418 = vadd.f32 0.0, %v417
        %v419 = vpop.f32.mrb[0].mxu0
        %420 = vdwg.mxu0
        %v421 = vmul.f32 %v418, 0.17677669
        %v422 = vlaneseq
        %v423 = vand.u32 %v422, 127
        %v424 = vld [vmem:[%s325] sm:$0xff]
        %s425 = smul.u32 %s31, 8
        %v426 = vstv %s425
        %v427 = vsub.s32 %v424, %v426
        %428 = vset.pattern.permute.xlu0 0
        %429 = vperm.xlu0 %428, %v427
        %v430 = vpop.permute.xlu0 %429
        %vm431 = vcmp.lt.s32.totalorder %v423, %v430
        %v432 = vsel %vm431, %v421, -1000000.0
        %v433 = vld [vmem:[#allocation2] sm:$0xff]
        %vm434 = vcmask 64512
        %v435 = vsel %vm434, %v432, -inf
        %436 = vmax.xlane.f32.xlu0 %v435
        %v437 = vpop.xlane.xlu0 %436
        %v438 = vmax.f32 %v433, %v437
        %v439 = vsub.f32 %v433, %v438
        %v440 = vmul.f32 %v439, 1.442695
        %v441 = vpow.pop %v440
        %443 = vset.pattern.permute.xlu0 0
        %444 = vperm.xlu0 %443, %v438
        %v445 = vpop.permute.xlu0 %444
        %v447 = vsub.f32 %v432, %v445
        %v448 = vmul.f32 %v447, 1.442695
        %v449 = vpow.pop %v448
        %v450 = vld [vmem:[#allocation3] sm:$0xff]
        %v451 = vmul.f32 %v441, %v450
        %v452 = vsel %vm434, %v449, 0.0
        %453 = vadd.xlane.f32.xlu0 %v452
        %v454 = vpop.xlane.xlu0 %453
        %v455 = vadd.f32 %v451, %v454
        %vm456 = vcmask 7168
        %457 = vst.msk [vmem:[#allocation3] sm:$0xff] %vm456, %v455
        %v458 = vld [vmem:[%s275] sm:$0xff]
        %v460 = vsel %vm434, %v449, 0
        %462 = vmatprep.subr.mxu0 0.0
        %463 = vmatpush1.msra.mxu0 %v458
        %464 = vmatprep.subr.mxu0 0.0
        %465 = vmatpush1.msra.mxu0 0.0
        %466 = vmatprep.subr.mxu0 0.0
        %467 = vmatpush1.msra.mxu0 0.0
        %468 = vmatprep.subr.mxu0 0.0
        %469 = vmatpush1.msra.mxu0 0.0
        %470 = vmatprep.subr.mxu0 0.0
        %471 = vmatpush1.msra.mxu0 0.0
        %472 = vmatprep.subr.mxu0 0.0
        %473 = vmatpush1.msra.mxu0 0.0
        %474 = vmatprep.subr.mxu0 0.0
        %475 = vmatpush1.msra.mxu0 0.0
        %476 = vmatprep.subr.mxu0 0.0
        %477 = vmatpush1.msra.mxu0 0.0
        %478 = vmatprep.subr.mxu0 0.0
        %479 = vmatpush1.msra.mxu0 0.0
        %480 = vmatprep.subr.mxu0 0.0
        %481 = vmatpush1.msra.mxu0 0.0
        %482 = vmatprep.subr.mxu0 0.0
        %483 = vmatpush1.msra.mxu0 0.0
        %484 = vmatprep.subr.mxu0 0.0
        %485 = vmatpush1.msra.mxu0 0.0
        %486 = vmatprep.subr.mxu0 0.0
        %487 = vmatpush1.msra.mxu0 0.0
        %488 = vmatprep.subr.mxu0 0.0
        %489 = vmatpush1.msra.mxu0 0.0
        %490 = vmatprep.subr.mxu0 0.0
        %491 = vmatpush1.msra.mxu0 0.0
        %492 = vmatprep.subr.mxu0 0.0
        %493 = vmatpush1.msra.mxu0 0.0
        %494 = vmatprep.subr.mxu0 0.0
        %495 = vmatpush1.msra.mxu0 0.0
        %496 = vmatprep.subr.mxu0 0.0
        %497 = vmatpush1.msra.mxu0 0.0
        %498 = vmatprep.subr.mxu0 0.0
        %499 = vmatpush1.msra.mxu0 0.0
        %500 = vmatprep.subr.mxu0 0.0
        %501 = vmatpush1.msra.mxu0 0.0
        %502 = vmatprep.subr.mxu0 0.0
        %503 = vmatpush1.msra.mxu0 0.0
        %504 = vmatprep.subr.mxu0 0.0
        %505 = vmatpush1.msra.mxu0 0.0
        %506 = vmatprep.subr.mxu0 0.0
        %507 = vmatpush1.msra.mxu0 0.0
        %508 = vmatprep.subr.mxu0 0.0
        %509 = vmatpush1.msra.mxu0 0.0
        %510 = vmatprep.subr.mxu0 0.0
        %511 = vmatpush1.msra.mxu0 0.0
        %512 = vmatprep.subr.mxu0 0.0
        %513 = vmatpush1.msra.mxu0 0.0
        %514 = vmatprep.subr.mxu0 0.0
        %515 = vmatpush1.msra.mxu0 0.0
        %516 = vmatprep.subr.mxu0 0.0
        %517 = vmatpush1.msra.mxu0 0.0
        %518 = vmatprep.subr.mxu0 0.0
        %519 = vmatpush1.msra.mxu0 0.0
        %520 = vmatprep.subr.mxu0 0.0
        %521 = vmatpush1.msra.mxu0 0.0
        %522 = vmatprep.subr.mxu0 0.0
        %523 = vmatpush1.msra.mxu0 0.0
        %524 = vmatprep.subr.mxu0 0.0
        %525 = vmatpush1.msra.mxu0 0.0
        %526 = vmatprep.mubr.f32.mxu0 0.0
        %527 = vmatmul.mubr.f32.gmra.mrb[0].mxu0 %v460
        %v528 = vpop.f32.mrb[0].mxu0
        %v529 = vadd.f32 0.0, %v528
        %v530 = vpop.f32.mrb[0].mxu0
        %531 = vdwg.mxu0
        %v532 = vld [vmem:[#allocation4] sm:$0xff]
        %534 = vset.pattern.permute.xlu0 0
        %535 = vperm.xlu0 %534, %v441
        %v536 = vpop.permute.xlu0 %535
        %v538 = vmul.f32 %v536, %v532
        %v539 = vadd.f32 %v538, %v529
        %540 = vst.msk [vmem:[#allocation4] sm:$0xff] %vm344, %v539
        %541 = vst.msk [vmem:[#allocation2] sm:$0xff] %vm456, %v438
        // Predicated region
        $region49: #{tpu_custom_call.1} parent=35 // pred_check
          %p542 = pneg %p333
        $region50: #{tpu_custom_call.1} parent=35 // pred_check_branch
          %544 = sbr.rel (%p542) target = $region52
        $region51: #{tpu_custom_call.1} parent=35 // pred_region
          %v545 = vld [vmem:[#allocation4] sm:$0xff]
          %v546 = vld [vmem:[#allocation3] sm:$0xff]
          %v547 = vrcp.pop %v546
          %v548 = vmul.f32 1.0, %v547
          %550 = vset.pattern.permute.xlu0 0
          %551 = vperm.xlu0 %550, %v548
          %v552 = vpop.permute.xlu0 %551
          %v554 = vmul.f32 %v545, %v552
          %555 = vst.msk [vmem:[%s318] sm:$0xff] %vm344, %v554
        $region52: #{tpu_custom_call.1} parent=35 // pred_fallthru
          _
        %s556 = sand.u32 %s165, 1
        %s557 = scalar_lea.sflag [#allocation7], %s556
        %s558 = sand.u32 %s165, 1
        %s559 = smul.addr %s558, 8
        %s560 = scalar_lea.vmem [#allocation10], %s559
        // Predicated region
        $region53: #{tpu_custom_call.1} parent=35 // pred_check
          %p561 = pneg %p175
        $region54: #{tpu_custom_call.1} parent=35 // pred_check_branch
          %563 = sbr.rel (%p561) target = $region56
        $region55: #{tpu_custom_call.1} parent=35 // pred_region
          %s565 = ssub.s32 128, 128
          %566 = vsyncadd %s557, %s565
          %s567 = sadd.s32 %s30, %s29
          %s568 = smul.addr %s567, 128
          %s569 = scalar_lea.hbm %s4, %s568
          %s571 = sshll.u32 %s560, 4
          %s572 = int_to_ptr.vmem [resolvable:$true] %s571
          %574 = dma.vmem_to_hbm [thread:$0]  %s572, 128, %s569, %s557
        $region56: #{tpu_custom_call.1} parent=35 // pred_fallthru
          _
      $region36: #{tpu_custom_call.1} parent=5 // pred_fallthru
        _
      %p575 = scmp.le.s32.totalorder 2, %s19
      // Predicated region
      $region57: #{tpu_custom_call.1} parent=5 // pred_check
        %p576 = pneg %p575
      $region58: #{tpu_custom_call.1} parent=5 // pred_check_branch
        %578 = sbr.rel (%p576) target = $region60
      $region59: #{tpu_custom_call.1} parent=5 // pred_region
        %s579 = ssub.s32 %s19, 2
        // Predicated region
        $region61: #{tpu_custom_call.1} parent=59 // pred_check
          %p580 = pneg %p181
        $region62: #{tpu_custom_call.1} parent=59 // pred_check_branch
          %582 = sbr.rel (%p580) target = $region64
        $region63: #{tpu_custom_call.1} parent=59 // pred_region
          %s583 = sand.u32 %s166, 1
          %s584 = scalar_lea.sflag [#allocation7], %s583
          %s585 = sand.u32 %s166, 1
          %s586 = smul.addr %s585, 8
          %s587 = scalar_lea.vmem [#allocation10], %s586
          %588 = dma.done %s584, 128
        $region64: #{tpu_custom_call.1} parent=59 // pred_fallthru
          _
      $region60: #{tpu_custom_call.1} parent=5 // pred_fallthru
        _
    $region6: #{tpu_custom_call.1} parent=1 // loop_footer
      %s23 = sadd.s32 1, %s19
    $region7: #{tpu_custom_call.1} parent=1 // loop_footer_branch
      %18 = sbr.rel target = $region3
    $region8: #{tpu_custom_call.1} parent=1 // loop_exit
      _
    %589 = vsyncpa [#allocation6], 1
    %s590 = scalar_lea.sflag [#allocation6], 1
    %591 = vsyncpa %s590, 1
    %592 = vsyncpa [#allocation9], 1
    %s593 = scalar_lea.sflag [#allocation9], 1
    %594 = vsyncpa %s593, 1
    %595 = vsyncpa [#allocation7], 1
    %s596 = scalar_lea.sflag [#allocation7], 1
    %597 = vsyncpa %s596, 1

</llo_original>
